<compile_context>
chip_gen: v7x
topology: tpu7x:2x2x1
jax: 0.10.0
libtpu: 0.0.40
codegen_flags: <defaults>
</compile_context>

<pallas_src>
import functools
import math

import jax
import jax.numpy as jnp
from jax.experimental import pallas as pl
from jax.experimental.pallas import tpu as pltpu


def _round_up(v, m):
    return ((v + m - 1) // m) * m


def _fc_kernel(*refs, weight_gain, bias_gain, activation, has_bias):
    if has_bias:
        x_ref, w_ref, b_ref, o_ref, acc_ref = refs
    else:
        x_ref, w_ref, o_ref, acc_ref = refs
        b_ref = None

    kk = pl.program_id(2)

    @pl.when(kk == 0)
    def _():
        acc_ref[...] = jnp.zeros_like(acc_ref)

    # MXU matmul on unscaled operands; accumulate in f32.
    acc_ref[...] += jnp.dot(x_ref[...], w_ref[...], preferred_element_type=jnp.float32)

    @pl.when(kk == pl.num_programs(2) - 1)
    def _():
        # Epilogue: fold weight_gain into the (small) accumulator, add bias,
        # apply activation, cast, lane-dense store.
        acc = acc_ref[...] * jnp.float32(weight_gain)
        if has_bias:
            b = b_ref[...].astype(jnp.float32)
            if bias_gain != 1.0:
                b = b * jnp.float32(bias_gain)
            acc = acc + b  # (1, TN) broadcasts over rows
        if activation == "lrelu":
            acc = jnp.where(acc >= 0, acc, jnp.float32(0.2) * acc)
        o_ref[...] = acc.astype(o_ref.dtype)


def fully_connected_pallas(x, weight, bias=None, *, lr_multiplier=1.0, activation="linear"):
    """x: [N, in_features]; weight: [out_features, in_features]; bias: [out_features] or None."""
    n, k = x.shape
    o, k2 = weight.shape
    assert k2 == k, "weight / x in_features mismatch"
    weight_gain = float(lr_multiplier) / math.sqrt(k)
    bias_gain = float(lr_multiplier)
    has_bias = bias is not None

    out_dtype = x.dtype
    bpe = jnp.dtype(x.dtype).itemsize
    out_bpe = jnp.dtype(out_dtype).itemsize

    # One-time layout change outside the kernel: weight as [K, O] (cast to x.dtype,
    # matching `self.weight.to(x.dtype)`); gain is applied post-matmul in the kernel.
    w_kn = weight.astype(x.dtype).T

    # ---- tile sizes ----
    TN = 256 if o > 128 else 128                       # lane-dense output (>=128)
    TM = 256 if n >= 256 else _round_up(max(n, 1), 8)  # batch tile (sublane multiple)

    # VMEM budget for double-buffered tiles (~20 MiB: safe on v5e/v6e/v7x scoped limits).
    # Prefer TK == K so the weight tile is resident across the whole batch axis.
    budget = 20 * 1024 * 1024
    fixed = 2 * TM * TN * out_bpe + TM * TN * 4 + 2 * TN * 4
    per_k = 2 * (TM + TN) * bpe
    tk_cap = max(128, ((budget - fixed) // per_k // 128) * 128)
    k_pad128 = _round_up(k, 128)
    TK = k_pad128 if k_pad128 <= tk_cap else tk_cap

    n_pad = _round_up(n, TM)
    o_pad = _round_up(o, TN)
    k_pad = _round_up(k, TK)

    # Zero-padding to tile multiples (zeros contribute nothing; lrelu(0)=0); sliced off after.
    x_p = x if (n_pad == n and k_pad == k) else jnp.pad(x, ((0, n_pad - n), (0, k_pad - k)))
    w_p = w_kn if (k_pad == k and o_pad == o) else jnp.pad(w_kn, ((0, k_pad - k), (0, o_pad - o)))

    inputs = [x_p, w_p]
    in_specs = [
        pl.BlockSpec((TM, TK), lambda j, i, kk: (i, kk)),
        # Independent of batch index i; with j outermost and TK == K the weight
        # block does not re-DMA across batch tiles.
        pl.BlockSpec((TK, TN), lambda j, i, kk: (kk, j)),
    ]
    if has_bias:
        b_p = bias.astype(jnp.float32).reshape(1, o)
        if o_pad != o:
            b_p = jnp.pad(b_p, ((0, 0), (0, o_pad - o)))
        inputs.append(b_p)
        in_specs.append(pl.BlockSpec((1, TN), lambda j, i, kk: (0, j)))

    grid = (o_pad // TN, n_pad // TM, k_pad // TK)

    kernel = functools.partial(
        _fc_kernel,
        weight_gain=weight_gain,
        bias_gain=bias_gain,
        activation=activation,
        has_bias=has_bias,
    )

    cost = pl.CostEstimate(
        flops=2 * n_pad * k_pad * o_pad,
        transcendentals=0,
        bytes_accessed=(n_pad * k_pad + k_pad * o_pad) * bpe
        + n_pad * o_pad * out_bpe
        + (o_pad * 4 if has_bias else 0),
    )

    out = pl.pallas_call(
        kernel,
        out_shape=jax.ShapeDtypeStruct((n_pad, o_pad), out_dtype),
        grid_spec=pltpu.PrefetchScalarGridSpec(
            num_scalar_prefetch=0,
            grid=grid,
            in_specs=in_specs,
            out_specs=pl.BlockSpec((TM, TN), lambda j, i, kk: (i, j)),
            scratch_shapes=[pltpu.VMEM((TM, TN), jnp.float32)],
        ),
        compiler_params=pltpu.CompilerParams(
            dimension_semantics=("parallel", "parallel", "arbitrary"),
            vmem_limit_bytes=32 * 1024 * 1024,
        ),
        cost_estimate=cost,
    )(*inputs)

    if n_pad != n or o_pad != o:
        out = out[:n, :o]
    return out


def _reference(x, weight, bias, *, lr_multiplier=1.0, activation="linear"):
    in_features = x.shape[1]
    w = weight.astype(x.dtype) * (lr_multiplier / math.sqrt(in_features))
    y = x @ w.T
    if bias is not None:
        y = y + bias.astype(x.dtype) * lr_multiplier
    if activation == "lrelu":
        y = jnp.where(y >= 0, y, 0.2 * y)
    return y


if __name__ == "__main__":
    key = jax.random.PRNGKey(0)
    k_x, k_w, k_b, k_x2, k_w2 = jax.random.split(key, 5)

    # Test 1: StyleGAN mapping-network style FC (bias + lrelu + lr_multiplier), tiny shapes.
    batch, in_features, out_features = 8, 32, 16
    lr_multiplier = 0.01
    weight = jax.random.normal(k_w, (out_features, in_features), jnp.float32) * (1.0 / lr_multiplier)
    bias = jax.random.normal(k_b, (out_features,), jnp.float32) / lr_multiplier
    x = jax.random.normal(k_x, (batch, in_features), jnp.float32)

    out = fully_connected_pallas(x, weight, bias, lr_multiplier=lr_multiplier, activation="lrelu")
    out = jax.block_until_ready(out)
    ref = _reference(x, weight, bias, lr_multiplier=lr_multiplier, activation="lrelu")
    assert out.shape == (batch, out_features)
    assert jnp.allclose(out, ref, atol=1e-4, rtol=1e-4), "mismatch vs reference (test 1)"

    # Test 2: no-bias, linear activation, non-aligned shapes (exercises padding + no-bias path).
    b2, i2, o2 = 40, 192, 96
    w2 = jax.random.normal(k_w2, (o2, i2), jnp.float32)
    x2 = jax.random.normal(k_x2, (b2, i2), jnp.float32)
    out2 = jax.block_until_ready(fully_connected_pallas(x2, w2, None, activation="linear"))
    ref2 = _reference(x2, w2, None, activation="linear")
    assert out2.shape == (b2, o2)
    assert jnp.allclose(out2, ref2, atol=1e-4, rtol=1e-4), "mismatch vs reference (test 2)"

    print("KERNEL_OK")
</pallas_src>

<mosaic_0001>
module attributes {stable_mosaic.version = 11 : i64} {
  func.func @_fc_kernel(%arg0: i32, %arg1: i32, %arg2: i32, %arg3: memref<8x128xf32, #tpu.memory_space<vmem>>, %arg4: memref<128x128xf32, #tpu.memory_space<vmem>>, %arg5: memref<1x128xf32, #tpu.memory_space<vmem>>, %arg6: memref<8x128xf32, #tpu.memory_space<vmem>>, %arg7: memref<8x128xf32, #tpu.memory_space<vmem>>) attributes {dimension_semantics = [#tpu.dimension_semantics<parallel>, #tpu.dimension_semantics<parallel>, #tpu.dimension_semantics<arbitrary>], iteration_bounds = array<i64: 1, 1, 1>, scalar_prefetch = 0 : i64, scratch_operands = 1 : i64, tpu.core_type = #tpu.core_type<tc>, window_params = [{transform_indices = @transform_0, window_bounds = array<i64: 8, 128>}, {transform_indices = @transform_1, window_bounds = array<i64: 128, 128>}, {transform_indices = @transform_2, window_bounds = array<i64: 1, 128>}, {transform_indices = @transform_3, window_bounds = array<i64: 8, 128>}]} {
    %c0_i32 = arith.constant 0 : i32
    %0 = arith.cmpi eq, %arg2, %c0_i32 : i32
    %1 = arith.extui %0 : i1 to i32
    %c0_i32_0 = arith.constant 0 : i32
    %2 = arith.cmpi ne, %1, %c0_i32_0 : i32
    scf.if %2 {
      %cst_10 = arith.constant 0.000000e+00 : f32
      %12 = vector.broadcast %cst_10 : f32 to vector<8x128xf32>
      %c0_11 = arith.constant 0 : index
      %c0_12 = arith.constant 0 : index
      %13 = vector.load %arg7[%c0_11, %c0_12] : memref<8x128xf32, #tpu.memory_space<vmem>>, vector<8x128xf32>
      tpu.vector_store %arg7[%c0_11, %c0_12], %12 {strides = array<i32>} : memref<8x128xf32, #tpu.memory_space<vmem>>, vector<8x128xf32>,
    } else {
    }
    %c0 = arith.constant 0 : index
    %c0_1 = arith.constant 0 : index
    %3 = vector.load %arg7[%c0, %c0_1] : memref<8x128xf32, #tpu.memory_space<vmem>>, vector<8x128xf32>
    %c0_2 = arith.constant 0 : index
    %c0_3 = arith.constant 0 : index
    %4 = vector.load %arg3[%c0_2, %c0_3] : memref<8x128xf32, #tpu.memory_space<vmem>>, vector<8x128xf32>
    %c0_4 = arith.constant 0 : index
    %c0_5 = arith.constant 0 : index
    %5 = vector.load %arg4[%c0_4, %c0_5] : memref<128x128xf32, #tpu.memory_space<vmem>>, vector<128x128xf32>
    %cst = arith.constant dense<0.000000e+00> : vector<8x128xf32>
    %6 = tpu.matmul %4, %5, %cst {dimension_numbers = #tpu.dot_dimension_numbers<[1], [0], [0], [1], [0, 0, 1, 1], [], []>} : vector<8x128xf32>, vector<128x128xf32>, vector<8x128xf32> -> vector<8x128xf32>
    %7 = arith.addf %3, %6 : vector<8x128xf32>
    %c0_6 = arith.constant 0 : index
    %c0_7 = arith.constant 0 : index
    %8 = vector.load %arg7[%c0_6, %c0_7] : memref<8x128xf32, #tpu.memory_space<vmem>>, vector<8x128xf32>
    tpu.vector_store %arg7[%c0_6, %c0_7], %7 {strides = array<i32>} : memref<8x128xf32, #tpu.memory_space<vmem>>, vector<8x128xf32>,
    %c0_i32_8 = arith.constant 0 : i32
    %9 = arith.cmpi eq, %arg2, %c0_i32_8 : i32
    %10 = arith.extui %9 : i1 to i32
    %c0_i32_9 = arith.constant 0 : i32
    %11 = arith.cmpi ne, %10, %c0_i32_9 : i32
    scf.if %11 {
      %c0_10 = arith.constant 0 : index
      %c0_11 = arith.constant 0 : index
      %12 = vector.load %arg7[%c0_10, %c0_11] : memref<8x128xf32, #tpu.memory_space<vmem>>, vector<8x128xf32>
      %cst_12 = arith.constant 0.00176776689 : f32
      %13 = vector.broadcast %cst_12 : f32 to vector<8x128xf32>
      %14 = arith.mulf %12, %13 : vector<8x128xf32>
      %c0_13 = arith.constant 0 : index
      %c0_14 = arith.constant 0 : index
      %15 = vector.load %arg5[%c0_13, %c0_14] : memref<1x128xf32, #tpu.memory_space<vmem>>, vector<1x128xf32>
      %cst_15 = arith.constant 0.00999999977 : f32
      %16 = vector.broadcast %cst_15 : f32 to vector<1x128xf32>
      %17 = arith.mulf %15, %16 : vector<1x128xf32>
      %18 = vector.broadcast %17 : vector<1x128xf32> to vector<8x128xf32>
      %19 = arith.addf %14, %18 : vector<8x128xf32>
      %cst_16 = arith.constant 0.000000e+00 : f32
      %20 = vector.broadcast %cst_16 : f32 to vector<8x128xf32>
      %21 = arith.cmpf oge, %19, %20 : vector<8x128xf32>
      %cst_17 = arith.constant 2.000000e-01 : f32
      %22 = vector.broadcast %cst_17 : f32 to vector<8x128xf32>
      %23 = arith.mulf %22, %19 : vector<8x128xf32>
      %24 = arith.select %21, %19, %23 : vector<8x128xi1>, vector<8x128xf32>
      %c0_18 = arith.constant 0 : index
      %c0_19 = arith.constant 0 : index
      %25 = vector.load %arg6[%c0_18, %c0_19] : memref<8x128xf32, #tpu.memory_space<vmem>>, vector<8x128xf32>
      tpu.vector_store %arg6[%c0_18, %c0_19], %24 {strides = array<i32>} : memref<8x128xf32, #tpu.memory_space<vmem>>, vector<8x128xf32>,
    } else {
    }
    return
  }
  func.func @transform_0(%arg0: i32, %arg1: i32, %arg2: i32) -> (i32, i32) {
    %c0_i32 = arith.constant 0 : i32
    return %arg1, %arg2 : i32, i32
  }
  func.func @transform_1(%arg0: i32, %arg1: i32, %arg2: i32) -> (i32, i32) {
    %c0_i32 = arith.constant 0 : i32
    return %arg2, %arg0 : i32, i32
  }
  func.func @transform_2(%arg0: i32, %arg1: i32, %arg2: i32) -> (i32, i32) {
    %c0_i32 = arith.constant 0 : i32
    %c0_i32_0 = arith.constant 0 : i32
    return %c0_i32, %arg0 : i32, i32
  }
  func.func @transform_3(%arg0: i32, %arg1: i32, %arg2: i32) -> (i32, i32) {
    %c0_i32 = arith.constant 0 : i32
    return %arg1, %arg0 : i32, i32
  }
}

</mosaic_0001>

<llo_original>
// kernel: tpu_custom_call.1
$region0: #{tpu_custom_call.1}
  #allocation0 [shape = 'u32[]', space=smem, size = 0x4, offset = 0x4, fixed_abs, tag = 'smem constant byte address 0x4 - core index']
  #allocation1 [shape = 'u32[144,128]{1,0:T(1,128)}', space=vmem, size = 0x12000, scoped, tag = 'internal scratch']
  #allocation2 [shape = 'f32[8,128]{1,0:T(8,128)}', space=vmem, size = 0x1000, scoped, tag = 'scratch operand']
  %s0 = inlined_call_operand.hbm [shape: f32[8,128], index: 0, kind: input, shape index: {}]
  %s1 = inlined_call_operand.hbm [shape: f32[128,128], index: 1, kind: input, shape index: {}]
  %s2 = inlined_call_operand.vmem [shape: f32[1,128], index: 2, kind: input, shape index: {}]
  %s3 = inlined_call_operand.hbm [shape: f32[8,128], index: 3, kind: output, shape index: {}]
  %s4 = sld [smem:[#allocation0]]
  $region38: #{tpu_custom_call.1} parent=0
    _
  %s6 = ssub.s32 1, %s4
  %s7 = scalar_select 0, %s6, %s4
  $region1: #{tpu_custom_call.1} parent=0
    #allocation3 [shape = 'u8[4096]{0}', space=vmem, size = 0x1000, scoped, tag = 'input window, operand 0, single buffered']
    #allocation4 [shape = 's32[1]{0}', space=sflag, size = 0x4, scoped, tag = 'scoped memory for tpu_custom_call.1']
    #allocation5 [shape = 's32[1]{0}', space=sflag, size = 0x4, scoped, tag = 'scoped memory for tpu_custom_call.1']
    #allocation6 [shape = 'u8[65536]{0}', space=vmem, size = 0x10000, scoped, tag = 'input window, operand 1, single buffered']
    #allocation7 [shape = 's32[1]{0}', space=sflag, size = 0x4, scoped, tag = 'scoped memory for tpu_custom_call.1']
    #allocation8 [shape = 'u8[4096]{0}', space=vmem, size = 0x1000, scoped, tag = 'output window, operand 0, single buffered']
    %8 = vsyncpa [#allocation4], 0
    %9 = vsyncpa [#allocation7], 0
    %10 = vsyncpa [#allocation5], 0
    // Predicated region
    $region2: #{tpu_custom_call.1} parent=1 // pred_check
      _
    $region3: #{tpu_custom_call.1} parent=1 // pred_check_branch
      %12 = sbr.rel (0) target = $region5
    $region4: #{tpu_custom_call.1} parent=1 // pred_region
      %s14 = ssub.s32 128, 128
      %15 = vsyncadd [#allocation4], %s14
      %s17 = sshll.u32 [#allocation3], 4
      %s18 = int_to_ptr.vmem [resolvable:$true] %s17
      %20 = dma.hbm_to_vmem [thread:$0]  %s0, 128, %s18, [#allocation4]
    $region5: #{tpu_custom_call.1} parent=1 // pred_fallthru
      _
    // Predicated region
    $region6: #{tpu_custom_call.1} parent=1 // pred_check
      _
    $region7: #{tpu_custom_call.1} parent=1 // pred_check_branch
      %22 = sbr.rel (0) target = $region9
    $region8: #{tpu_custom_call.1} parent=1 // pred_region
      %s24 = ssub.s32 2048, 2048
      %25 = vsyncadd [#allocation7], %s24
      %s26 = sshll.u32 [#allocation6], 4
      %s27 = int_to_ptr.vmem [resolvable:$true] %s26
      %32 = dma.hbm_to_vmem [thread:$0]  %s1, 2048, %s27, [#allocation7], 128, 128, 8
    $region9: #{tpu_custom_call.1} parent=1 // pred_fallthru
      _
    // Predicated region
    $region10: #{tpu_custom_call.1} parent=1 // pred_check
      _
    $region11: #{tpu_custom_call.1} parent=1 // pred_check_branch
      %34 = sbr.rel (0) target = $region13
    $region12: #{tpu_custom_call.1} parent=1 // pred_region
      _
    $region13: #{tpu_custom_call.1} parent=1 // pred_fallthru
      _
    // Predicated region
    $region14: #{tpu_custom_call.1} parent=1 // pred_check
      _
    $region15: #{tpu_custom_call.1} parent=1 // pred_check_branch
      %36 = sbr.rel (0) target = $region17
    $region16: #{tpu_custom_call.1} parent=1 // pred_region
      %37 = dma.done [#allocation4], 128
    $region17: #{tpu_custom_call.1} parent=1 // pred_fallthru
      _
    // Predicated region
    $region18: #{tpu_custom_call.1} parent=1 // pred_check
      _
    $region19: #{tpu_custom_call.1} parent=1 // pred_check_branch
      %39 = sbr.rel (0) target = $region21
    $region20: #{tpu_custom_call.1} parent=1 // pred_region
      %40 = dma.done [#allocation7], 2048
    $region21: #{tpu_custom_call.1} parent=1 // pred_fallthru
      _
    %p41 = scmp.eq.s32.totalorder 0, 0
    // Predicated region
    $region22: #{tpu_custom_call.1} parent=1 // pred_check
      %p42 = pneg %p41
    $region23: #{tpu_custom_call.1} parent=1 // pred_check_branch
      %44 = sbr.rel (%p42) target = $region25
    $region24: #{tpu_custom_call.1} parent=1 // pred_region
      %45 = vst [vmem:[#allocation2] sm:$0xff] 0.0
    $region25: #{tpu_custom_call.1} parent=1 // pred_fallthru
      _
    %v46 = vld [vmem:[#allocation2] sm:$0xff]
    %v47 = vld [vmem:[#allocation3] sm:$0xff]
    %v48 = vld [vmem:[#allocation6] sm:$0xff]
    %v49 = vld [vmem:[#allocation6 + $0x8] sm:$0xff]
    %v50 = vld [vmem:[#allocation6 + $0x10] sm:$0xff]
    %v51 = vld [vmem:[#allocation6 + $0x18] sm:$0xff]
    %v52 = vld [vmem:[#allocation6 + $0x20] sm:$0xff]
    %v53 = vld [vmem:[#allocation6 + $0x28] sm:$0xff]
    %v54 = vld [vmem:[#allocation6 + $0x30] sm:$0xff]
    %v55 = vld [vmem:[#allocation6 + $0x38] sm:$0xff]
    %v56 = vld [vmem:[#allocation6 + $0x40] sm:$0xff]
    %v57 = vld [vmem:[#allocation6 + $0x48] sm:$0xff]
    %v58 = vld [vmem:[#allocation6 + $0x50] sm:$0xff]
    %v59 = vld [vmem:[#allocation6 + $0x58] sm:$0xff]
    %v60 = vld [vmem:[#allocation6 + $0x60] sm:$0xff]
    %v61 = vld [vmem:[#allocation6 + $0x68] sm:$0xff]
    %v62 = vld [vmem:[#allocation6 + $0x70] sm:$0xff]
    %v63 = vld [vmem:[#allocation6 + $0x78] sm:$0xff]
    %64 = vmatprep.subr.mxu0 0.0
    %65 = vmatpush1.msra.mxu0 %v48
    %66 = vmatprep.subr.mxu0 0.0
    %67 = vmatpush1.msra.mxu0 %v49
    %68 = vmatprep.subr.mxu0 0.0
    %69 = vmatpush1.msra.mxu0 %v50
    %70 = vmatprep.subr.mxu0 0.0
    %71 = vmatpush1.msra.mxu0 %v51
    %72 = vmatprep.subr.mxu0 0.0
    %73 = vmatpush1.msra.mxu0 %v52
    %74 = vmatprep.subr.mxu0 0.0
    %75 = vmatpush1.msra.mxu0 %v53
    %76 = vmatprep.subr.mxu0 0.0
    %77 = vmatpush1.msra.mxu0 %v54
    %78 = vmatprep.subr.mxu0 0.0
    %79 = vmatpush1.msra.mxu0 %v55
    %80 = vmatprep.subr.mxu0 0.0
    %81 = vmatpush1.msra.mxu0 %v56
    %82 = vmatprep.subr.mxu0 0.0
    %83 = vmatpush1.msra.mxu0 %v57
    %84 = vmatprep.subr.mxu0 0.0
    %85 = vmatpush1.msra.mxu0 %v58
    %86 = vmatprep.subr.mxu0 0.0
    %87 = vmatpush1.msra.mxu0 %v59
    %88 = vmatprep.subr.mxu0 0.0
    %89 = vmatpush1.msra.mxu0 %v60
    %90 = vmatprep.subr.mxu0 0.0
    %91 = vmatpush1.msra.mxu0 %v61
    %92 = vmatprep.subr.mxu0 0.0
    %93 = vmatpush1.msra.mxu0 %v62
    %94 = vmatprep.subr.mxu0 0.0
    %95 = vmatpush1.msra.mxu0 %v63
    %96 = vmatprep.subr.mxu0 0.0
    %97 = vmatpush1.msra.mxu0 0.0
    %98 = vmatprep.subr.mxu0 0.0
    %99 = vmatpush1.msra.mxu0 0.0
    %100 = vmatprep.subr.mxu0 0.0
    %101 = vmatpush1.msra.mxu0 0.0
    %102 = vmatprep.subr.mxu0 0.0
    %103 = vmatpush1.msra.mxu0 0.0
    %104 = vmatprep.subr.mxu0 0.0
    %105 = vmatpush1.msra.mxu0 0.0
    %106 = vmatprep.subr.mxu0 0.0
    %107 = vmatpush1.msra.mxu0 0.0
    %108 = vmatprep.subr.mxu0 0.0
    %109 = vmatpush1.msra.mxu0 0.0
    %110 = vmatprep.subr.mxu0 0.0
    %111 = vmatpush1.msra.mxu0 0.0
    %112 = vmatprep.subr.mxu0 0.0
    %113 = vmatpush1.msra.mxu0 0.0
    %114 = vmatprep.subr.mxu0 0.0
    %115 = vmatpush1.msra.mxu0 0.0
    %116 = vmatprep.subr.mxu0 0.0
    %117 = vmatpush1.msra.mxu0 0.0
    %118 = vmatprep.subr.mxu0 0.0
    %119 = vmatpush1.msra.mxu0 0.0
    %120 = vmatprep.subr.mxu0 0.0
    %121 = vmatpush1.msra.mxu0 0.0
    %122 = vmatprep.subr.mxu0 0.0
    %123 = vmatpush1.msra.mxu0 0.0
    %124 = vmatprep.subr.mxu0 0.0
    %125 = vmatpush1.msra.mxu0 0.0
    %126 = vmatprep.subr.mxu0 0.0
    %127 = vmatpush1.msra.mxu0 0.0
    %128 = vmatprep.mubr.f32.mxu0 0.0
    %129 = vmatmul.mubr.f32.gmra.mrb[0].mxu0 %v47
    %v130 = vpop.f32.mrb[0].mxu0
    %v131 = vadd.f32 0.0, %v130
    %v132 = vpop.f32.mrb[0].mxu0
    %133 = vdwg.mxu0
    %v134 = vadd.f32 %v46, %v131
    %135 = vst [vmem:[#allocation2] sm:$0xff] %v134
    // Predicated region
    $region26: #{tpu_custom_call.1} parent=1 // pred_check
      %p136 = pneg %p41
    $region27: #{tpu_custom_call.1} parent=1 // pred_check_branch
      %138 = sbr.rel (%p136) target = $region29
    $region28: #{tpu_custom_call.1} parent=1 // pred_region
      %v139 = vld [vmem:[#allocation2] sm:$0xff]
      %v140 = vmul.f32 %v139, 0.0017677669
      %v141 = vld [vmem:[%s2] sm:$0x1]
      %v142 = vmul.f32 %v141, 0.01
      %v144 = vlaneseq
      %v145 = vshrl.u32 %v144, 7
      %v146 = vsub.s32 0, %v145
      %v147 = vrot.slane %v142, %v146
      %v149 = vadd.f32 %v140, %v147
      %vm150 = vcmp.ge.f32.partialorder %v149, 0.0
      %v151 = vmul.f32 %v149, 0.2
      %v152 = vsel %vm150, %v149, %v151
      %153 = vst [vmem:[#allocation8] sm:$0xff] %v152
    $region29: #{tpu_custom_call.1} parent=1 // pred_fallthru
      _
    // Predicated region
    $region30: #{tpu_custom_call.1} parent=1 // pred_check
      _
    $region31: #{tpu_custom_call.1} parent=1 // pred_check_branch
      %155 = sbr.rel (0) target = $region33
    $region32: #{tpu_custom_call.1} parent=1 // pred_region
      %s157 = ssub.s32 128, 128
      %158 = vsyncadd [#allocation5], %s157
      %s160 = sshll.u32 [#allocation8], 4
      %s161 = int_to_ptr.vmem [resolvable:$true] %s160
      %163 = dma.vmem_to_hbm [thread:$0]  %s161, 128, %s3, [#allocation5]
    $region33: #{tpu_custom_call.1} parent=1 // pred_fallthru
      _
    // Predicated region
    $region34: #{tpu_custom_call.1} parent=1 // pred_check
      _
    $region35: #{tpu_custom_call.1} parent=1 // pred_check_branch
      %165 = sbr.rel (0) target = $region37
    $region36: #{tpu_custom_call.1} parent=1 // pred_region
      %166 = dma.done [#allocation5], 128
    $region37: #{tpu_custom_call.1} parent=1 // pred_fallthru
      _
    %167 = vsyncpa [#allocation4], 1
    %168 = vsyncpa [#allocation7], 1
    %169 = vsyncpa [#allocation5], 1

</llo_original>
